<compile_context>
chip_gen: v6e
topology: v6e:2x2x1
jax: 0.10.0
libtpu: 0.0.40
codegen_flags: <defaults>
</compile_context>

<pallas_src>
import functools

import jax
import jax.numpy as jnp
from jax.experimental import pallas as pl
from jax.experimental.pallas import tpu as pltpu

LANE = 128


def _round_up(x: int, m: int) -> int:
    return ((x + m - 1) // m) * m


def _fused_mlp_kernel(*refs, n_layers: int, use_bias: bool):
    # refs = (x, w1[, b1], w2[, b2], ..., wN[, bN], out)
    x_ref = refs[0]
    o_ref = refs[-1]
    h = x_ref[...].astype(jnp.float32)
    idx = 1
    for i in range(n_layers):
        w = refs[idx][...]
        idx += 1
        # bf16 operands -> native MXU rate; accumulate in f32.
        h = jnp.dot(h.astype(jnp.bfloat16), w, preferred_element_type=jnp.float32)
        if use_bias:
            b = refs[idx][...]
            idx += 1
            h = h + b  # f32 VPU add
        if i < n_layers - 1:
            h = jnp.tanh(h)  # f32 EUP transcendental; intermediates stay on-chip
    o_ref[...] = h.astype(o_ref.dtype)


def prepare_params(params, use_bias: bool = True):
    """One-time preparation: pad every layer's output width to a multiple of 128
    lanes (zero pad), chain padded widths through the stack, and cast matmul
    operands (weights) to bf16. Biases stay f32. Done once, never per call."""
    prepared = []
    prev_pad = None
    for li, (w, b) in enumerate(params):
        d_in, d_out = w.shape
        d_in_pad = d_in if li == 0 else prev_pad
        d_out_pad = _round_up(d_out, LANE)
        w_p = jnp.zeros((d_in_pad, d_out_pad), jnp.bfloat16)
        w_p = w_p.at[:d_in, :d_out].set(w.astype(jnp.bfloat16))
        entry = [w_p]
        if use_bias:
            b_p = jnp.zeros((1, d_out_pad), jnp.float32)
            b_p = b_p.at[:, :d_out].set(b.astype(jnp.float32))
            entry.append(b_p)
        prepared.append(tuple(entry))
        prev_pad = d_out_pad
    d_out_real = params[-1][0].shape[1]
    return prepared, d_out_real


def mlp_forward(x, prepared_params, d_out_real, *, use_bias: bool = True,
                return_padded: bool = False, block_m: int = 256):
    """Fused MLP forward: one pallas_call for the whole network.

    Weights/biases come pre-padded + pre-cast from prepare_params (no per-call
    padding ops). If return_padded=True the lane-dense [B, d_out_pad] slab is
    returned directly (consumer slices / fuses), skipping the wrapper slice.
    """
    n_layers = len(prepared_params)
    B, d_in = x.shape
    d_out_pad = prepared_params[-1][0].shape[1]

    flat_inputs = [x]
    for entry in prepared_params:
        flat_inputs.extend(entry)

    # Parallel batch grid axis: shards rows across TensorCores on v7x, and is a
    # single iteration (neutral) at small B on v5e/v6e.
    bm = min(_round_up(B, 8), block_m)
    grid = (pl.cdiv(B, bm),)

    in_specs = [pl.BlockSpec((bm, d_in), lambda i: (i, 0))]
    for entry in prepared_params:
        for a in entry:
            in_specs.append(pl.BlockSpec(a.shape, lambda i: (0, 0)))
    out_specs = pl.BlockSpec((bm, d_out_pad), lambda i: (i, 0))

    # Explicit scoped-VMEM budget from the actual resident working set
    # (x2 for Pallas double-buffering of every operand) plus headroom.
    resident = 2 * bm * d_in * x.dtype.itemsize + 2 * bm * d_out_pad * 4
    for entry in prepared_params:
        for a in entry:
            resident += 2 * a.size * a.dtype.itemsize
    vmem_limit = int(min(max(resident * 2 + (1 << 20), 16 << 20), 128 << 20))

    out_padded = pl.pallas_call(
        functools.partial(_fused_mlp_kernel, n_layers=n_layers, use_bias=use_bias),
        out_shape=jax.ShapeDtypeStruct((B, d_out_pad), jnp.float32),
        grid=grid,
        in_specs=in_specs,
        out_specs=out_specs,
        compiler_params=pltpu.CompilerParams(
            dimension_semantics=("parallel",),
            vmem_limit_bytes=vmem_limit,
        ),
    )(*flat_inputs)

    if return_padded:
        return out_padded
    return out_padded[:, :d_out_real]


def init_mlp_params(key, sizes, bias=True):
    """Deterministic init mimicking nn.Linear (uniform(-1/sqrt(fan_in), +1/sqrt(fan_in)))."""
    params = []
    for i in range(len(sizes) - 1):
        fan_in, fan_out = sizes[i], sizes[i + 1]
        key, kw, kb = jax.random.split(key, 3)
        bound = 1.0 / (fan_in ** 0.5)
        w = jax.random.uniform(kw, (fan_in, fan_out), jnp.float32, -bound, bound)
        if bias:
            b = jax.random.uniform(kb, (1, fan_out), jnp.float32, -bound, bound)
        else:
            b = jnp.zeros((1, fan_out), jnp.float32)
        params.append((w, b))
    return params


def mlp_reference(x, params, operand_dtype=jnp.float32):
    """Reference forward. operand_dtype=bfloat16 emulates the kernel's MXU path."""
    h = x.astype(jnp.float32)
    n_layers = len(params)
    for i, (w, b) in enumerate(params):
        h = jnp.dot(h.astype(operand_dtype), w.astype(operand_dtype),
                    preferred_element_type=jnp.float32) + b.astype(jnp.float32)
        if i < n_layers - 1:
            h = jnp.tanh(h)
    return h


if __name__ == "__main__":
    # MLP(sizes): Linear(32,64) Tanh Linear(64,48) Tanh Linear(48,16)
    sizes = (32, 64, 48, 16)
    batch = 8  # NOTE: MXU-starved at B=8; aggregate rows >=128/256 before micro-tuning.

    key = jax.random.PRNGKey(0)
    key, kx = jax.random.split(key)
    x = jax.random.normal(kx, (batch, sizes[0]), jnp.float32)
    params = init_mlp_params(key, sizes, bias=True)

    prepared, d_out_real = prepare_params(params, use_bias=True)

    out = mlp_forward(x, prepared, d_out_real, use_bias=True)
    out = jax.block_until_ready(out)
    assert out.shape == (batch, sizes[-1])

    # Tight check vs a reference that uses the same bf16-operand / f32-accum math.
    ref_bf16 = mlp_reference(x, params, operand_dtype=jnp.bfloat16)
    assert jnp.allclose(out, ref_bf16, atol=2e-3, rtol=2e-3)

    # Loose sanity check vs the pure-f32 PyTorch-equivalent forward.
    ref_f32 = mlp_reference(x, params, operand_dtype=jnp.float32)
    assert jnp.allclose(out, ref_f32, atol=5e-2, rtol=5e-2)

    print("KERNEL_OK")
</pallas_src>

<mosaic_0001>
module attributes {stable_mosaic.version = 11 : i64} {
  func.func @_fused_mlp_kernel(%arg0: i32, %arg1: memref<8x32xf32, #tpu.memory_space<vmem>>, %arg2: memref<32x128xbf16, #tpu.memory_space<vmem>>, %arg3: memref<1x128xf32, #tpu.memory_space<vmem>>, %arg4: memref<128x128xbf16, #tpu.memory_space<vmem>>, %arg5: memref<1x128xf32, #tpu.memory_space<vmem>>, %arg6: memref<128x128xbf16, #tpu.memory_space<vmem>>, %arg7: memref<1x128xf32, #tpu.memory_space<vmem>>, %arg8: memref<8x128xf32, #tpu.memory_space<vmem>>) attributes {dimension_semantics = [#tpu.dimension_semantics<parallel>], iteration_bounds = array<i64: 1>, scalar_prefetch = 0 : i64, scratch_operands = 0 : i64, tpu.core_type = #tpu.core_type<tc>, window_params = [{transform_indices = @transform_0, window_bounds = array<i64: 8, 32>}, {pipeline_mode = #tpu.pipeline_mode<synchronous>, transform_indices = @transform_1, window_bounds = array<i64: 32, 128>}, {pipeline_mode = #tpu.pipeline_mode<synchronous>, transform_indices = @transform_2, window_bounds = array<i64: 1, 128>}, {pipeline_mode = #tpu.pipeline_mode<synchronous>, transform_indices = @transform_3, window_bounds = array<i64: 128, 128>}, {pipeline_mode = #tpu.pipeline_mode<synchronous>, transform_indices = @transform_4, window_bounds = array<i64: 1, 128>}, {pipeline_mode = #tpu.pipeline_mode<synchronous>, transform_indices = @transform_5, window_bounds = array<i64: 128, 128>}, {pipeline_mode = #tpu.pipeline_mode<synchronous>, transform_indices = @transform_6, window_bounds = array<i64: 1, 128>}, {transform_indices = @transform_7, window_bounds = array<i64: 8, 128>}]} {
    %c0 = arith.constant 0 : index
    %c0_0 = arith.constant 0 : index
    %0 = vector.load %arg1[%c0, %c0_0] : memref<8x32xf32, #tpu.memory_space<vmem>>, vector<8x32xf32>
    %c0_1 = arith.constant 0 : index
    %c0_2 = arith.constant 0 : index
    %1 = vector.load %arg2[%c0_1, %c0_2] : memref<32x128xbf16, #tpu.memory_space<vmem>>, vector<32x128xbf16>
    %2 = arith.truncf %0 : vector<8x32xf32> to vector<8x32xbf16>
    %cst = arith.constant dense<0.000000e+00> : vector<8x128xf32>
    %3 = tpu.matmul %2, %1, %cst {dimension_numbers = #tpu.dot_dimension_numbers<[1], [0], [0], [1], [0, 0, 1, 1], [], []>} : vector<8x32xbf16>, vector<32x128xbf16>, vector<8x128xf32> -> vector<8x128xf32>
    %c0_3 = arith.constant 0 : index
    %c0_4 = arith.constant 0 : index
    %4 = vector.load %arg3[%c0_3, %c0_4] : memref<1x128xf32, #tpu.memory_space<vmem>>, vector<1x128xf32>
    %5 = vector.broadcast %4 : vector<1x128xf32> to vector<8x128xf32>
    %6 = arith.addf %3, %5 : vector<8x128xf32>
    %7 = math.tanh %6 : vector<8x128xf32>
    %c0_5 = arith.constant 0 : index
    %c0_6 = arith.constant 0 : index
    %8 = vector.load %arg4[%c0_5, %c0_6] : memref<128x128xbf16, #tpu.memory_space<vmem>>, vector<128x128xbf16>
    %9 = arith.truncf %7 : vector<8x128xf32> to vector<8x128xbf16>
    %cst_7 = arith.constant dense<0.000000e+00> : vector<8x128xf32>
    %10 = tpu.matmul %9, %8, %cst_7 {dimension_numbers = #tpu.dot_dimension_numbers<[1], [0], [0], [1], [0, 0, 1, 1], [], []>} : vector<8x128xbf16>, vector<128x128xbf16>, vector<8x128xf32> -> vector<8x128xf32>
    %c0_8 = arith.constant 0 : index
    %c0_9 = arith.constant 0 : index
    %11 = vector.load %arg5[%c0_8, %c0_9] : memref<1x128xf32, #tpu.memory_space<vmem>>, vector<1x128xf32>
    %12 = vector.broadcast %11 : vector<1x128xf32> to vector<8x128xf32>
    %13 = arith.addf %10, %12 : vector<8x128xf32>
    %14 = math.tanh %13 : vector<8x128xf32>
    %c0_10 = arith.constant 0 : index
    %c0_11 = arith.constant 0 : index
    %15 = vector.load %arg6[%c0_10, %c0_11] : memref<128x128xbf16, #tpu.memory_space<vmem>>, vector<128x128xbf16>
    %16 = arith.truncf %14 : vector<8x128xf32> to vector<8x128xbf16>
    %cst_12 = arith.constant dense<0.000000e+00> : vector<8x128xf32>
    %17 = tpu.matmul %16, %15, %cst_12 {dimension_numbers = #tpu.dot_dimension_numbers<[1], [0], [0], [1], [0, 0, 1, 1], [], []>} : vector<8x128xbf16>, vector<128x128xbf16>, vector<8x128xf32> -> vector<8x128xf32>
    %c0_13 = arith.constant 0 : index
    %c0_14 = arith.constant 0 : index
    %18 = vector.load %arg7[%c0_13, %c0_14] : memref<1x128xf32, #tpu.memory_space<vmem>>, vector<1x128xf32>
    %19 = vector.broadcast %18 : vector<1x128xf32> to vector<8x128xf32>
    %20 = arith.addf %17, %19 : vector<8x128xf32>
    %c0_15 = arith.constant 0 : index
    %c0_16 = arith.constant 0 : index
    %21 = vector.load %arg8[%c0_15, %c0_16] : memref<8x128xf32, #tpu.memory_space<vmem>>, vector<8x128xf32>
    tpu.vector_store %arg8[%c0_15, %c0_16], %20 {strides = array<i32>} : memref<8x128xf32, #tpu.memory_space<vmem>>, vector<8x128xf32>,
    return
  }
  func.func @transform_0(%arg0: i32) -> (i32, i32) {
    %c0_i32 = arith.constant 0 : i32
    %c0_i32_0 = arith.constant 0 : i32
    return %arg0, %c0_i32 : i32, i32
  }
  func.func @transform_1(%arg0: i32) -> (i32, i32) {
    %c0_i32 = arith.constant 0 : i32
    %c0_i32_0 = arith.constant 0 : i32
    %c0_i32_1 = arith.constant 0 : i32
    return %c0_i32, %c0_i32_0 : i32, i32
  }
  func.func @transform_2(%arg0: i32) -> (i32, i32) {
    %c0_i32 = arith.constant 0 : i32
    %c0_i32_0 = arith.constant 0 : i32
    %c0_i32_1 = arith.constant 0 : i32
    return %c0_i32, %c0_i32_0 : i32, i32
  }
  func.func @transform_3(%arg0: i32) -> (i32, i32) {
    %c0_i32 = arith.constant 0 : i32
    %c0_i32_0 = arith.constant 0 : i32
    %c0_i32_1 = arith.constant 0 : i32
    return %c0_i32, %c0_i32_0 : i32, i32
  }
  func.func @transform_4(%arg0: i32) -> (i32, i32) {
    %c0_i32 = arith.constant 0 : i32
    %c0_i32_0 = arith.constant 0 : i32
    %c0_i32_1 = arith.constant 0 : i32
    return %c0_i32, %c0_i32_0 : i32, i32
  }
  func.func @transform_5(%arg0: i32) -> (i32, i32) {
    %c0_i32 = arith.constant 0 : i32
    %c0_i32_0 = arith.constant 0 : i32
    %c0_i32_1 = arith.constant 0 : i32
    return %c0_i32, %c0_i32_0 : i32, i32
  }
  func.func @transform_6(%arg0: i32) -> (i32, i32) {
    %c0_i32 = arith.constant 0 : i32
    %c0_i32_0 = arith.constant 0 : i32
    %c0_i32_1 = arith.constant 0 : i32
    return %c0_i32, %c0_i32_0 : i32, i32
  }
  func.func @transform_7(%arg0: i32) -> (i32, i32) {
    %c0_i32 = arith.constant 0 : i32
    %c0_i32_0 = arith.constant 0 : i32
    return %arg0, %c0_i32 : i32, i32
  }
}

</mosaic_0001>

<llo_original>
// kernel: tpu_custom_call.1
$region0: #{tpu_custom_call.1}
  #allocation0 [shape = 'u32[]', space=smem, size = 0x4, offset = 0x4, fixed_abs, tag = 'smem constant byte address 0x4 - core index']
  #allocation1 [shape = 'u32[144,128]{1,0:T(1,128)}', space=vmem, size = 0x12000, scoped, tag = 'internal scratch']
  %s0 = inlined_call_operand.hbm [shape: f32[8,32], index: 0, kind: input, shape index: {}]
  %s1 = inlined_call_operand.hbm [shape: bf16[32,128], index: 1, kind: input, shape index: {}]
  %s2 = inlined_call_operand.vmem [shape: f32[1,128], index: 2, kind: input, shape index: {}]
  %s3 = inlined_call_operand.hbm [shape: bf16[128,128], index: 3, kind: input, shape index: {}]
  %s4 = inlined_call_operand.vmem [shape: f32[1,128], index: 4, kind: input, shape index: {}]
  %s5 = inlined_call_operand.hbm [shape: bf16[128,128], index: 5, kind: input, shape index: {}]
  %s6 = inlined_call_operand.vmem [shape: f32[1,128], index: 6, kind: input, shape index: {}]
  %s7 = inlined_call_operand.hbm [shape: f32[8,128], index: 7, kind: output, shape index: {}]
  %s8 = sld [smem:[#allocation0]]
  $region54: #{tpu_custom_call.1} parent=0
    _
  %s10 = ssub.s32 1, %s8
  %s11 = scalar_select 0, %s10, %s8
  $region1: #{tpu_custom_call.1} parent=0
    #allocation2 [shape = 'u8[4096]{0}', space=vmem, size = 0x1000, scoped, tag = 'input window, operand 0, single buffered']
    #allocation3 [shape = 's32[1]{0}', space=sflag, size = 0x4, scoped, tag = 'scoped memory for tpu_custom_call.1']
    #allocation4 [shape = 's32[1]{0}', space=sflag, size = 0x4, scoped, tag = 'scoped memory for tpu_custom_call.1']
    #allocation5 [shape = 'u8[8192]{0}', space=vmem, size = 0x2000, scoped, tag = 'input window, operand 1, single buffered']
    #allocation6 [shape = 's32[1]{0}', space=sflag, size = 0x4, scoped, tag = 'scoped memory for tpu_custom_call.1']
    #allocation7 [shape = 'u8[32768]{0}', space=vmem, size = 0x8000, scoped, tag = 'input window, operand 3, single buffered']
    #allocation8 [shape = 'u8[32768]{0}', space=vmem, size = 0x8000, scoped, tag = 'input window, operand 5, single buffered']
    #allocation9 [shape = 's32[1]{0}', space=sflag, size = 0x4, scoped, tag = 'scoped memory for tpu_custom_call.1']
    #allocation10 [shape = 'u8[4096]{0}', space=vmem, size = 0x1000, scoped, tag = 'output window, operand 0, single buffered']
    %12 = vsyncpa [#allocation3], 0
    %13 = vsyncpa [#allocation6], 0
    %14 = vsyncpa [#allocation9], 0
    %15 = vsyncpa [#allocation4], 0
    // Predicated region
    $region2: #{tpu_custom_call.1} parent=1 // pred_check
      _
    $region3: #{tpu_custom_call.1} parent=1 // pred_check_branch
      %17 = sbr.rel (0) target = $region5
    $region4: #{tpu_custom_call.1} parent=1 // pred_region
      %s19 = ssub.s32 128, 128
      %20 = vsyncadd [#allocation3], %s19
      %s22 = sshll.u32 [#allocation2], 4
      %s23 = int_to_ptr.vmem [resolvable:$true] %s22
      %25 = dma.hbm_to_vmem [thread:$0]  %s0, 128, %s23, [#allocation3]
    $region5: #{tpu_custom_call.1} parent=1 // pred_fallthru
      _
    // Predicated region
    $region6: #{tpu_custom_call.1} parent=1 // pred_check
      _
    $region7: #{tpu_custom_call.1} parent=1 // pred_check_branch
      %27 = sbr.rel (0) target = $region9
    $region8: #{tpu_custom_call.1} parent=1 // pred_region
      %s29 = ssub.s32 256, 256
      %30 = vsyncadd [#allocation6], %s29
      %s31 = sshll.u32 [#allocation5], 4
      %s32 = int_to_ptr.vmem [resolvable:$true] %s31
      %37 = dma.hbm_to_vmem [thread:$0]  %s1, 256, %s32, [#allocation6], 64, 64, 4
    $region9: #{tpu_custom_call.1} parent=1 // pred_fallthru
      _
    // Predicated region
    $region10: #{tpu_custom_call.1} parent=1 // pred_check
      _
    $region11: #{tpu_custom_call.1} parent=1 // pred_check_branch
      %39 = sbr.rel (0) target = $region13
    $region12: #{tpu_custom_call.1} parent=1 // pred_region
      _
    $region13: #{tpu_custom_call.1} parent=1 // pred_fallthru
      _
    // Predicated region
    $region14: #{tpu_custom_call.1} parent=1 // pred_check
      _
    $region15: #{tpu_custom_call.1} parent=1 // pred_check_branch
      %41 = sbr.rel (0) target = $region17
    $region16: #{tpu_custom_call.1} parent=1 // pred_region
      %s43 = ssub.s32 1024, 1024
      %44 = vsyncadd [#allocation6], %s43
      %s45 = sshll.u32 [#allocation7], 4
      %s46 = int_to_ptr.vmem [resolvable:$true] %s45
      %51 = dma.hbm_to_vmem [thread:$0]  %s3, 1024, %s46, [#allocation6], 64, 64, 4
    $region17: #{tpu_custom_call.1} parent=1 // pred_fallthru
      _
    // Predicated region
    $region18: #{tpu_custom_call.1} parent=1 // pred_check
      _
    $region19: #{tpu_custom_call.1} parent=1 // pred_check_branch
      %53 = sbr.rel (0) target = $region21
    $region20: #{tpu_custom_call.1} parent=1 // pred_region
      _
    $region21: #{tpu_custom_call.1} parent=1 // pred_fallthru
      _
    // Predicated region
    $region22: #{tpu_custom_call.1} parent=1 // pred_check
      _
    $region23: #{tpu_custom_call.1} parent=1 // pred_check_branch
      %55 = sbr.rel (0) target = $region25
    $region24: #{tpu_custom_call.1} parent=1 // pred_region
      %s57 = ssub.s32 1024, 1024
      %58 = vsyncadd [#allocation9], %s57
      %s59 = sshll.u32 [#allocation8], 4
      %s60 = int_to_ptr.vmem [resolvable:$true] %s59
      %65 = dma.hbm_to_vmem [thread:$0]  %s5, 1024, %s60, [#allocation9], 64, 64, 4
    $region25: #{tpu_custom_call.1} parent=1 // pred_fallthru
      _
    // Predicated region
    $region26: #{tpu_custom_call.1} parent=1 // pred_check
      _
    $region27: #{tpu_custom_call.1} parent=1 // pred_check_branch
      %67 = sbr.rel (0) target = $region29
    $region28: #{tpu_custom_call.1} parent=1 // pred_region
      _
    $region29: #{tpu_custom_call.1} parent=1 // pred_fallthru
      _
    // Predicated region
    $region30: #{tpu_custom_call.1} parent=1 // pred_check
      _
    $region31: #{tpu_custom_call.1} parent=1 // pred_check_branch
      %69 = sbr.rel (0) target = $region33
    $region32: #{tpu_custom_call.1} parent=1 // pred_region
      %70 = dma.done [#allocation3], 128
    $region33: #{tpu_custom_call.1} parent=1 // pred_fallthru
      _
    // Predicated region
    $region34: #{tpu_custom_call.1} parent=1 // pred_check
      _
    $region35: #{tpu_custom_call.1} parent=1 // pred_check_branch
      %72 = sbr.rel (0) target = $region37
    $region36: #{tpu_custom_call.1} parent=1 // pred_region
      %73 = dma.done [#allocation6], 256
    $region37: #{tpu_custom_call.1} parent=1 // pred_fallthru
      _
    // Predicated region
    $region38: #{tpu_custom_call.1} parent=1 // pred_check
      _
    $region39: #{tpu_custom_call.1} parent=1 // pred_check_branch
      %75 = sbr.rel (0) target = $region41
    $region40: #{tpu_custom_call.1} parent=1 // pred_region
      %76 = dma.done [#allocation6], 1024
    $region41: #{tpu_custom_call.1} parent=1 // pred_fallthru
      _
    // Predicated region
    $region42: #{tpu_custom_call.1} parent=1 // pred_check
      _
    $region43: #{tpu_custom_call.1} parent=1 // pred_check_branch
      %78 = sbr.rel (0) target = $region45
    $region44: #{tpu_custom_call.1} parent=1 // pred_region
      %79 = dma.done [#allocation9], 1024
    $region45: #{tpu_custom_call.1} parent=1 // pred_fallthru
      _
    %v81 = vld [vmem:[#allocation2] sm:$0xff]
    %v82 = vld [vmem:[#allocation5] sm:$0xf]
    %v83 = vld [vmem:[#allocation5 + $0x4] sm:$0xf]
    %v84 = vld [vmem:[#allocation5 + $0x8] sm:$0xf]
    %v85 = vld [vmem:[#allocation5 + $0xc] sm:$0xf]
    %v86 = vpack.c.bf16 %v81, %v81
    %v87 = vld [vmem:[%s2] sm:$0x1]
    %v89 = vlaneseq
    %v90 = vshrl.u32 %v89, 7
    %v91 = vsub.s32 0, %v90
    %v92 = vrot.slane %v87, %v91
    %v98 = vunpack.c.l.b16 %v82
    %v99 = vunpack.c.l.b16 %v83
    %v100 = vunpack.c.l.b16 %v84
    %v101 = vunpack.c.l.b16 %v85
    %v102 = vpack.c.b16 %v99, %v98
    %v103 = vpack.c.b16 %v101, %v100
    %vm106 = vcmask 261120
    %v108 = vsel %vm106, %v86, 0
    %110 = vmatprep.subr.bf16.mxu0 0
    %111 = vmatpush1.bf16.msra.mxu0 0
    %112 = vmatprep.subr.bf16.mxu0 0
    %113 = vmatpush1.bf16.msra.mxu0 0
    %114 = vmatprep.subr.bf16.mxu0 0
    %115 = vmatpush1.bf16.msra.mxu0 0
    %116 = vmatprep.subr.bf16.mxu0 0
    %117 = vmatpush1.bf16.msra.mxu0 0
    %118 = vmatprep.subr.bf16.mxu0 0
    %119 = vmatpush1.bf16.msra.mxu0 0
    %120 = vmatprep.subr.bf16.mxu0 0
    %121 = vmatpush1.bf16.msra.mxu0 0
    %122 = vmatprep.subr.bf16.mxu0 0
    %123 = vmatpush1.bf16.msra.mxu0 %v103
    %124 = vmatprep.subr.bf16.mxu0 0
    %125 = vmatpush1.bf16.msra.mxu0 %v102
    %126 = vmatprep.subr.bf16.mxu0 0
    %127 = vmatpush2.bf16.msra.mxu0 0
    %128 = vmatprep.subr.bf16.mxu0 0
    %129 = vmatpush2.bf16.msra.mxu0 0
    %130 = vmatprep.subr.bf16.mxu0 0
    %131 = vmatpush2.bf16.msra.mxu0 0
    %132 = vmatprep.subr.bf16.mxu0 0
    %133 = vmatpush2.bf16.msra.mxu0 0
    %134 = vmatprep.subr.bf16.mxu0 0
    %135 = vmatpush2.bf16.msra.mxu0 0
    %136 = vmatprep.subr.bf16.mxu0 0
    %137 = vmatpush2.bf16.msra.mxu0 0
    %138 = vmatprep.subr.bf16.mxu0 0
    %139 = vmatpush2.bf16.msra.mxu0 0
    %140 = vmatprep.subr.bf16.mxu0 0
    %141 = vmatpush2.bf16.msra.mxu0 0
    %142 = vmatprep.mubr.bf16.mxu0 0
    %143 = vmatmul.mubr.bf16.gmra.mxu0 %v108
    %v144 = vpop.f32.mrf.mxu0
    %v145 = vadd.f32 %v92, %v144
    %v146 = vpop.f32.mrf.mxu0
    %v147 = vpop.f32.mrf.mxu0
    %v148 = vpop.f32.mrf.mxu0
    %149 = vdwg.mxu0
    %v150 = vtanh.pop %v145
    %v151 = vld [vmem:[#allocation7] sm:$0xf]
    %v152 = vld [vmem:[#allocation7 + $0x4] sm:$0xf]
    %v153 = vld [vmem:[#allocation7 + $0x8] sm:$0xf]
    %v154 = vld [vmem:[#allocation7 + $0xc] sm:$0xf]
    %v155 = vld [vmem:[#allocation7 + $0x10] sm:$0xf]
    %v156 = vld [vmem:[#allocation7 + $0x14] sm:$0xf]
    %v157 = vld [vmem:[#allocation7 + $0x18] sm:$0xf]
    %v158 = vld [vmem:[#allocation7 + $0x1c] sm:$0xf]
    %v159 = vld [vmem:[#allocation7 + $0x20] sm:$0xf]
    %v160 = vld [vmem:[#allocation7 + $0x24] sm:$0xf]
    %v161 = vld [vmem:[#allocation7 + $0x28] sm:$0xf]
    %v162 = vld [vmem:[#allocation7 + $0x2c] sm:$0xf]
    %v163 = vld [vmem:[#allocation7 + $0x30] sm:$0xf]
    %v164 = vld [vmem:[#allocation7 + $0x34] sm:$0xf]
    %v165 = vld [vmem:[#allocation7 + $0x38] sm:$0xf]
    %v166 = vld [vmem:[#allocation7 + $0x3c] sm:$0xf]
    %v167 = vpack.c.bf16 %v150, %v150
    %v168 = vld [vmem:[%s4] sm:$0x1]
    %v170 = vlaneseq
    %v171 = vshrl.u32 %v170, 7
    %v172 = vsub.s32 0, %v171
    %v173 = vrot.slane %v168, %v172
    %v191 = vunpack.c.l.b16 %v151
    %v192 = vunpack.c.l.b16 %v152
    %v193 = vunpack.c.l.b16 %v153
    %v194 = vunpack.c.l.b16 %v154
    %v195 = vunpack.c.l.b16 %v155
    %v196 = vunpack.c.l.b16 %v156
    %v197 = vunpack.c.l.b16 %v157
    %v198 = vunpack.c.l.b16 %v158
    %v199 = vunpack.c.l.b16 %v159
    %v200 = vunpack.c.l.b16 %v160
    %v201 = vunpack.c.l.b16 %v161
    %v202 = vunpack.c.l.b16 %v162
    %v203 = vunpack.c.l.b16 %v163
    %v204 = vunpack.c.l.b16 %v164
    %v205 = vunpack.c.l.b16 %v165
    %v206 = vunpack.c.l.b16 %v166
    %v207 = vpack.c.b16 %v192, %v191
    %v208 = vpack.c.b16 %v194, %v193
    %v209 = vpack.c.b16 %v196, %v195
    %v210 = vpack.c.b16 %v198, %v197
    %v211 = vpack.c.b16 %v200, %v199
    %v212 = vpack.c.b16 %v202, %v201
    %v213 = vpack.c.b16 %v204, %v203
    %v214 = vpack.c.b16 %v206, %v205
    %223 = vmatprep.subr.bf16.mxu0 0
    %224 = vmatpush1.bf16.msra.mxu0 %v214
    %225 = vmatprep.subr.bf16.mxu0 0
    %226 = vmatpush1.bf16.msra.mxu0 %v213
    %227 = vmatprep.subr.bf16.mxu0 0
    %228 = vmatpush1.bf16.msra.mxu0 %v212
    %229 = vmatprep.subr.bf16.mxu0 0
    %230 = vmatpush1.bf16.msra.mxu0 %v211
    %231 = vmatprep.subr.bf16.mxu0 0
    %232 = vmatpush1.bf16.msra.mxu0 %v210
    %233 = vmatprep.subr.bf16.mxu0 0
    %234 = vmatpush1.bf16.msra.mxu0 %v209
    %235 = vmatprep.subr.bf16.mxu0 0
    %236 = vmatpush1.bf16.msra.mxu0 %v208
    %237 = vmatprep.subr.bf16.mxu0 0
    %238 = vmatpush1.bf16.msra.mxu0 %v207
    %239 = vmatprep.subr.bf16.mxu0 0
    %240 = vmatpush2.bf16.msra.mxu0 0
    %241 = vmatprep.subr.bf16.mxu0 0
    %242 = vmatpush2.bf16.msra.mxu0 0
    %243 = vmatprep.subr.bf16.mxu0 0
    %244 = vmatpush2.bf16.msra.mxu0 0
    %245 = vmatprep.subr.bf16.mxu0 0
    %246 = vmatpush2.bf16.msra.mxu0 0
    %247 = vmatprep.subr.bf16.mxu0 0
    %248 = vmatpush2.bf16.msra.mxu0 0
    %249 = vmatprep.subr.bf16.mxu0 0
    %250 = vmatpush2.bf16.msra.mxu0 0
    %251 = vmatprep.subr.bf16.mxu0 0
    %252 = vmatpush2.bf16.msra.mxu0 0
    %253 = vmatprep.subr.bf16.mxu0 0
    %254 = vmatpush2.bf16.msra.mxu0 0
    %255 = vmatprep.mubr.bf16.mxu0 0
    %256 = vmatmul.mubr.bf16.gmra.mxu0 %v167
    %v257 = vpop.f32.mrf.mxu0
    %v258 = vadd.f32 %v173, %v257
    %v259 = vpop.f32.mrf.mxu0
    %v260 = vpop.f32.mrf.mxu0
    %v261 = vpop.f32.mrf.mxu0
    %262 = vdwg.mxu0
    %v263 = vtanh.pop %v258
    %v264 = vld [vmem:[#allocation8] sm:$0xf]
    %v265 = vld [vmem:[#allocation8 + $0x4] sm:$0xf]
    %v266 = vld [vmem:[#allocation8 + $0x8] sm:$0xf]
    %v267 = vld [vmem:[#allocation8 + $0xc] sm:$0xf]
    %v268 = vld [vmem:[#allocation8 + $0x10] sm:$0xf]
    %v269 = vld [vmem:[#allocation8 + $0x14] sm:$0xf]
    %v270 = vld [vmem:[#allocation8 + $0x18] sm:$0xf]
    %v271 = vld [vmem:[#allocation8 + $0x1c] sm:$0xf]
    %v272 = vld [vmem:[#allocation8 + $0x20] sm:$0xf]
    %v273 = vld [vmem:[#allocation8 + $0x24] sm:$0xf]
    %v274 = vld [vmem:[#allocation8 + $0x28] sm:$0xf]
    %v275 = vld [vmem:[#allocation8 + $0x2c] sm:$0xf]
    %v276 = vld [vmem:[#allocation8 + $0x30] sm:$0xf]
    %v277 = vld [vmem:[#allocation8 + $0x34] sm:$0xf]
    %v278 = vld [vmem:[#allocation8 + $0x38] sm:$0xf]
    %v279 = vld [vmem:[#allocation8 + $0x3c] sm:$0xf]
    %v280 = vpack.c.bf16 %v263, %v263
    %v281 = vld [vmem:[%s6] sm:$0x1]
    %v283 = vlaneseq
    %v284 = vshrl.u32 %v283, 7
    %v285 = vsub.s32 0, %v284
    %v286 = vrot.slane %v281, %v285
    %v304 = vunpack.c.l.b16 %v264
    %v305 = vunpack.c.l.b16 %v265
    %v306 = vunpack.c.l.b16 %v266
    %v307 = vunpack.c.l.b16 %v267
    %v308 = vunpack.c.l.b16 %v268
    %v309 = vunpack.c.l.b16 %v269
    %v310 = vunpack.c.l.b16 %v270
    %v311 = vunpack.c.l.b16 %v271
    %v312 = vunpack.c.l.b16 %v272
    %v313 = vunpack.c.l.b16 %v273
    %v314 = vunpack.c.l.b16 %v274
    %v315 = vunpack.c.l.b16 %v275
    %v316 = vunpack.c.l.b16 %v276
    %v317 = vunpack.c.l.b16 %v277
    %v318 = vunpack.c.l.b16 %v278
    %v319 = vunpack.c.l.b16 %v279
    %v320 = vpack.c.b16 %v305, %v304
    %v321 = vpack.c.b16 %v307, %v306
    %v322 = vpack.c.b16 %v309, %v308
    %v323 = vpack.c.b16 %v311, %v310
    %v324 = vpack.c.b16 %v313, %v312
    %v325 = vpack.c.b16 %v315, %v314
    %v326 = vpack.c.b16 %v317, %v316
    %v327 = vpack.c.b16 %v319, %v318
    %336 = vmatprep.subr.bf16.mxu0 0
    %337 = vmatpush1.bf16.msra.mxu0 %v327
    %338 = vmatprep.subr.bf16.mxu0 0
    %339 = vmatpush1.bf16.msra.mxu0 %v326
    %340 = vmatprep.subr.bf16.mxu0 0
    %341 = vmatpush1.bf16.msra.mxu0 %v325
    %342 = vmatprep.subr.bf16.mxu0 0
    %343 = vmatpush1.bf16.msra.mxu0 %v324
    %344 = vmatprep.subr.bf16.mxu0 0
    %345 = vmatpush1.bf16.msra.mxu0 %v323
    %346 = vmatprep.subr.bf16.mxu0 0
    %347 = vmatpush1.bf16.msra.mxu0 %v322
    %348 = vmatprep.subr.bf16.mxu0 0
    %349 = vmatpush1.bf16.msra.mxu0 %v321
    %350 = vmatprep.subr.bf16.mxu0 0
    %351 = vmatpush1.bf16.msra.mxu0 %v320
    %352 = vmatprep.subr.bf16.mxu0 0
    %353 = vmatpush2.bf16.msra.mxu0 0
    %354 = vmatprep.subr.bf16.mxu0 0
    %355 = vmatpush2.bf16.msra.mxu0 0
    %356 = vmatprep.subr.bf16.mxu0 0
    %357 = vmatpush2.bf16.msra.mxu0 0
    %358 = vmatprep.subr.bf16.mxu0 0
    %359 = vmatpush2.bf16.msra.mxu0 0
    %360 = vmatprep.subr.bf16.mxu0 0
    %361 = vmatpush2.bf16.msra.mxu0 0
    %362 = vmatprep.subr.bf16.mxu0 0
    %363 = vmatpush2.bf16.msra.mxu0 0
    %364 = vmatprep.subr.bf16.mxu0 0
    %365 = vmatpush2.bf16.msra.mxu0 0
    %366 = vmatprep.subr.bf16.mxu0 0
    %367 = vmatpush2.bf16.msra.mxu0 0
    %368 = vmatprep.mubr.bf16.mxu0 0
    %369 = vmatmul.mubr.bf16.gmra.mxu0 %v280
    %v370 = vpop.f32.mrf.mxu0
    %v371 = vadd.f32 %v286, %v370
    %v372 = vpop.f32.mrf.mxu0
    %v373 = vpop.f32.mrf.mxu0
    %v374 = vpop.f32.mrf.mxu0
    %375 = vdwg.mxu0
    %376 = vst [vmem:[#allocation10] sm:$0xff] %v371
    // Predicated region
    $region46: #{tpu_custom_call.1} parent=1 // pred_check
      _
    $region47: #{tpu_custom_call.1} parent=1 // pred_check_branch
      %378 = sbr.rel (0) target = $region49
    $region48: #{tpu_custom_call.1} parent=1 // pred_region
      %s380 = ssub.s32 128, 128
      %381 = vsyncadd [#allocation4], %s380
      %s383 = sshll.u32 [#allocation10], 4
      %s384 = int_to_ptr.vmem [resolvable:$true] %s383
      %386 = dma.vmem_to_hbm [thread:$0]  %s384, 128, %s7, [#allocation4]
    $region49: #{tpu_custom_call.1} parent=1 // pred_fallthru
      _
    // Predicated region
    $region50: #{tpu_custom_call.1} parent=1 // pred_check
      _
    $region51: #{tpu_custom_call.1} parent=1 // pred_check_branch
      %388 = sbr.rel (0) target = $region53
    $region52: #{tpu_custom_call.1} parent=1 // pred_region
      %389 = dma.done [#allocation4], 128
    $region53: #{tpu_custom_call.1} parent=1 // pred_fallthru
      _
    %390 = vsyncpa [#allocation3], 1
    %391 = vsyncpa [#allocation6], 1
    %392 = vsyncpa [#allocation9], 1
    %393 = vsyncpa [#allocation4], 1

</llo_original>
